<compile_context>
chip_gen: v7x
topology: tpu7x:2x2x1
jax: 0.10.0
libtpu: 0.0.40
codegen_flags: <defaults>
</compile_context>

<pallas_src>
import functools

import jax
import jax.numpy as jnp
from jax import lax
from jax.experimental import pallas as pl
from jax.experimental.pallas import tpu as pltpu


def _channel_attention_kernel(x_ref, w1t_ref, w2t_ref, o_ref, sum_acc, max_acc,
                              *, n_sub, hw_tile, hw_true, inv_hw, needs_mask):
    # x_ref   : (Bt, C, HWt)  native dtype -- current spatial slab
    # w1t_ref : (C, Cr)  f32  -- fc1.weight transposed (one-time, in wrapper)
    # w2t_ref : (Cr, C)  f32  -- fc2.weight transposed
    # o_ref   : (Bt, 1, C)    -- sigmoid(channel attention) for this B tile
    # sum_acc : (Bt, C, 128) f32   lane-resident running sum
    # max_acc : (Bt, C, 128) f32   lane-resident running max
    k = pl.program_id(1)

    @pl.when(k == 0)
    def _init():
        sum_acc[...] = jnp.zeros_like(sum_acc)
        max_acc[...] = jnp.full_like(max_acc, -jnp.inf)

    base = k * hw_tile  # global HW offset of this tile (only used for pad mask)

    def _accumulate(off):
        # One 128-lane chunk: cast to f32 and fold into the lane-resident
        # accumulators with pure VALU adds/maxes (no cross-lane XLU work and
        # no sublane->lane relayout inside the streaming loop).
        slab = x_ref[:, :, pl.ds(off, 128)].astype(jnp.float32)  # (Bt, C, 128)
        sum_acc[...] += slab                 # zero padding is exact for the sum
        if needs_mask:
            lane = lax.broadcasted_iota(jnp.int32, (1, 1, 128), 2)
            pos = base + off + lane
            slab = jnp.where(pos < hw_true, slab, -jnp.inf)
        max_acc[...] = jnp.maximum(max_acc[...], slab)

    if n_sub <= 8:
        # Short fixed trip-count: fully unrolled with static lane offsets.
        for c in range(n_sub):
            _accumulate(c * 128)
    else:
        def _body(c, carry):
            _accumulate(pl.multiple_of(c * 128, 128))
            return carry
        lax.fori_loop(0, n_sub, _body, 0)

    @pl.when(k == pl.num_programs(1) - 1)
    def _finalize():
        bt = o_ref.shape[0]
        # Single cross-lane reduce per batch tile (hoisted out of the stream).
        pooled_avg = jnp.sum(sum_acc[...], axis=-1) * inv_hw      # (Bt, C)
        pooled_max = jnp.max(max_acc[...], axis=-1)               # (Bt, C)
        # Fuse both MLP branches into one MXU pass by stacking along M.
        # (The concat is over the tiny pooled (Bt, C) rows only -- negligible.)
        stacked = jnp.concatenate([pooled_avg, pooled_max], axis=0)  # (2Bt, C)
        h = jnp.dot(stacked, w1t_ref[...],
                    preferred_element_type=jnp.float32)           # (2Bt, Cr)
        h = jnp.maximum(h, 0.0)                                   # ReLU
        y = jnp.dot(h, w2t_ref[...],
                    preferred_element_type=jnp.float32)           # (2Bt, C)
        out = jax.nn.sigmoid(y[:bt] + y[bt:])                     # avg + max
        o_ref[...] = out.reshape(o_ref.shape).astype(o_ref.dtype)


def _default_hw_budget_bytes():
    # Generation-aware per-buffer budget for the streamed x tile: bigger tiles
    # amortize the ~0.35 us per-grid-step overhead, but must still fit twice
    # (double buffering) inside VMEM (only 64 MiB physical on v7x).
    try:
        vmem = pltpu.get_tpu_info().vmem_capacity_bytes
        return int(min(12 << 20, max(4 << 20, vmem // 8)))
    except Exception:
        return 8 << 20


def _pick_b_tile(B):
    # Guarantee >= 2 batch tiles whenever B >= 2 so the "parallel" grid axis
    # can feed both TensorCores on v7x.  Bt is a *leading* dim of every block
    # (output is (Bt, 1, C)) so it is not subject to the multiple-of-8 rule.
    if B <= 1:
        return 1
    for d in range(B // 2, 0, -1):
        if B % d == 0:
            return d
    return 1


def _pick_hw_tile(hw_pad, C, Bt, itemsize, budget_bytes):
    # hw_pad is a multiple of 128.  Pick the largest multiple of 128 that
    # divides hw_pad while keeping Bt*C*HWt*itemsize under the per-buffer
    # budget (minimum one 128-lane chunk; the explicit vmem_limit_bytes in the
    # wrapper covers the large-C overshoot case).
    n_chunks = hw_pad // 128
    bytes_per_chunk = Bt * C * 128 * itemsize
    max_chunks = max(1, budget_bytes // bytes_per_chunk)
    if max_chunks >= n_chunks:
        return hw_pad
    for cand in range(int(max_chunks), 0, -1):
        if n_chunks % cand == 0:
            return cand * 128
    return 128


def channel_attention(x, w1, w2, *, hw_tile_budget_bytes=None):
    """CBAM ChannelAttention forward.

    x : (B, C, H, W), float dtype (streamed natively, accumulated in f32)
    w1: fc1.weight, (Cr, C) or (Cr, C, 1, 1)  (PyTorch layout, no bias)
    w2: fc2.weight, (C, Cr) or (C, Cr, 1, 1)
    Returns (B, C, 1, 1) in x.dtype, matching the PyTorch module output.
    """
    B, C, H, W = x.shape
    HW = H * W
    w1_2d = w1.reshape(w1.shape[0], -1)               # (Cr, C)
    w2_2d = w2.reshape(w2.shape[0], -1)               # (C, Cr)
    Cr = w1_2d.shape[0]

    # One-time weight transposes (tiny) so both in-kernel matmuls are plain
    # (M,K)x(K,N) -- no per-finalize relayout in front of the MXU.
    w1t = jnp.transpose(w1_2d).astype(jnp.float32)    # (C, Cr)
    w2t = jnp.transpose(w2_2d).astype(jnp.float32)    # (Cr, C)

    # Stream x in its NATIVE dtype; pad HW up to a multiple of 128 so the
    # streaming grid also works for non-aligned spatial sizes (zero padding is
    # exact for the mean; the kernel masks padded lanes for the max).
    x_flat = x.reshape(B, C, HW)
    hw_pad = ((HW + 127) // 128) * 128
    if hw_pad != HW:
        x_flat = jnp.pad(x_flat, ((0, 0), (0, 0), (0, hw_pad - HW)))

    Bt = _pick_b_tile(B)
    itemsize = jnp.dtype(x.dtype).itemsize
    if hw_tile_budget_bytes is None:
        hw_tile_budget_bytes = _default_hw_budget_bytes()
    HWt = _pick_hw_tile(hw_pad, C, Bt, itemsize, hw_tile_budget_bytes)
    n_sub = HWt // 128
    grid = (B // Bt, hw_pad // HWt)

    out_dtype = x.dtype
    kernel = functools.partial(
        _channel_attention_kernel,
        n_sub=n_sub, hw_tile=HWt, hw_true=HW, inv_hw=1.0 / HW,
        needs_mask=(hw_pad != HW))

    # Explicit scoped-VMEM limit: 2x (double-buffered) blocks + scratch + slack.
    x_tile_bytes = Bt * C * HWt * itemsize
    w_bytes = 2 * C * Cr * 4
    out_tile_bytes = Bt * C * jnp.dtype(out_dtype).itemsize
    scratch_bytes = 2 * Bt * C * 128 * 4
    vmem_limit = int(2 * (x_tile_bytes + out_tile_bytes + w_bytes)
                     + scratch_bytes + (2 << 20))
    vmem_limit = max(vmem_limit, 32 << 20)

    out = pl.pallas_call(
        kernel,
        out_shape=jax.ShapeDtypeStruct((B, 1, C), out_dtype),
        grid_spec=pltpu.PrefetchScalarGridSpec(
            num_scalar_prefetch=0,
            grid=grid,
            in_specs=[
                pl.BlockSpec((Bt, C, HWt), lambda i, k: (i, 0, k)),
                pl.BlockSpec((C, Cr), lambda i, k: (0, 0)),
                pl.BlockSpec((Cr, C), lambda i, k: (0, 0)),
            ],
            out_specs=pl.BlockSpec((Bt, 1, C), lambda i, k: (i, 0, 0)),
            scratch_shapes=[
                pltpu.VMEM((Bt, C, 128), jnp.float32),  # lane-resident sum
                pltpu.VMEM((Bt, C, 128), jnp.float32),  # lane-resident max
            ],
        ),
        compiler_params=pltpu.CompilerParams(
            dimension_semantics=("parallel", "arbitrary"),
            vmem_limit_bytes=vmem_limit,
        ),
    )(x_flat, w1t, w2t)

    return out.reshape(B, C, 1, 1)


def channel_attention_ref(x, w1, w2):
    """Pure-JAX reference mirroring the PyTorch forward (f32 math)."""
    xf = x.astype(jnp.float32)
    w1_2d = w1.reshape(w1.shape[0], -1).astype(jnp.float32)  # (Cr, C)
    w2_2d = w2.reshape(w2.shape[0], -1).astype(jnp.float32)  # (C, Cr)
    avg = jnp.mean(xf, axis=(2, 3))   # (B, C)
    mx = jnp.max(xf, axis=(2, 3))     # (B, C)

    def mlp(v):
        return jnp.maximum(v @ w1_2d.T, 0.0) @ w2_2d.T

    return jax.nn.sigmoid(mlp(avg) + mlp(mx))[:, :, None, None]


if __name__ == "__main__":
    # Shapes consistent with the module: in_planes must be >= ratio (=16).
    B, C, H, W = 2, 64, 16, 16
    ratio = 16
    Cr = C // ratio

    key = jax.random.PRNGKey(0)
    kx, k1, k2, kx2 = jax.random.split(key, 4)

    x = jax.random.normal(kx, (B, C, H, W), dtype=jnp.float32)
    # PyTorch weight shapes: fc1 (Cr, C, 1, 1), fc2 (C, Cr, 1, 1) -> squeezed.
    w1 = jax.random.normal(k1, (Cr, C), dtype=jnp.float32) * 0.1
    w2 = jax.random.normal(k2, (C, Cr), dtype=jnp.float32) * 0.1

    ref = channel_attention_ref(x, w1, w2)

    # 1) Default (generation-aware) tiling.
    out = jax.block_until_ready(channel_attention(x, w1, w2))
    assert out.shape == (B, C, 1, 1)
    assert jnp.allclose(out, ref, atol=1e-4, rtol=1e-4), "mismatch vs reference"

    # 2) Tiny budget -> multi-step streaming reduction over HW.
    out_tiled = jax.block_until_ready(
        channel_attention(x, w1, w2, hw_tile_budget_bytes=32 * 1024))
    assert jnp.allclose(out_tiled, ref, atol=1e-4, rtol=1e-4), \
        "mismatch vs reference (tiled reduction)"

    # 3) Native bf16 streaming (no wrapper-side f32 cast of x).
    x_bf16 = x.astype(jnp.bfloat16)
    ref_bf16 = channel_attention_ref(x_bf16, w1, w2)
    out_bf16 = jax.block_until_ready(channel_attention(x_bf16, w1, w2))
    assert out_bf16.dtype == jnp.bfloat16
    assert jnp.allclose(out_bf16.astype(jnp.float32), ref_bf16,
                        atol=3e-2, rtol=3e-2), "mismatch vs reference (bf16)"

    # 4) Non-128-aligned spatial size with all-negative values: exercises the
    #    zero-pad + masked-max path (unmasked zero padding would corrupt max).
    H2 = W2 = 9
    x_neg = jax.random.normal(kx2, (B, C, H2, W2), dtype=jnp.float32) - 4.0
    ref_neg = channel_attention_ref(x_neg, w1, w2)
    out_neg = jax.block_until_ready(channel_attention(x_neg, w1, w2))
    assert jnp.allclose(out_neg, ref_neg, atol=1e-4, rtol=1e-4), \
        "mismatch vs reference (padded/masked max)"

    print("KERNEL_OK")
</pallas_src>

<mosaic_0001>
module attributes {stable_mosaic.version = 11 : i64} {
  func.func @_channel_attention_kernel(%arg0: i32, %arg1: i32, %arg2: memref<1x64x256xf32, #tpu.memory_space<vmem>>, %arg3: memref<64x4xf32, #tpu.memory_space<vmem>>, %arg4: memref<4x64xf32, #tpu.memory_space<vmem>>, %arg5: memref<1x1x64xf32, #tpu.memory_space<vmem>>, %arg6: memref<1x64x128xf32, #tpu.memory_space<vmem>>, %arg7: memref<1x64x128xf32, #tpu.memory_space<vmem>>) attributes {dimension_semantics = [#tpu.dimension_semantics<parallel>, #tpu.dimension_semantics<arbitrary>], iteration_bounds = array<i64: 2, 1>, scalar_prefetch = 0 : i64, scratch_operands = 2 : i64, tpu.core_type = #tpu.core_type<tc>, window_params = [{transform_indices = @transform_0, window_bounds = array<i64: 1, 64, 256>}, {pipeline_mode = #tpu.pipeline_mode<synchronous>, transform_indices = @transform_1, window_bounds = array<i64: 64, 4>}, {pipeline_mode = #tpu.pipeline_mode<synchronous>, transform_indices = @transform_2, window_bounds = array<i64: 4, 64>}, {transform_indices = @transform_3, window_bounds = array<i64: 1, 1, 64>}]} {
    %c0_i32 = arith.constant 0 : i32
    %0 = arith.cmpi eq, %arg1, %c0_i32 : i32
    %1 = arith.extui %0 : i1 to i32
    %c0_i32_0 = arith.constant 0 : i32
    %2 = arith.cmpi ne, %1, %c0_i32_0 : i32
    scf.if %2 {
      %cst = arith.constant 0.000000e+00 : f32
      %20 = vector.broadcast %cst : f32 to vector<1x64x128xf32>
      %c0_31 = arith.constant 0 : index
      %c0_32 = arith.constant 0 : index
      %c0_33 = arith.constant 0 : index
      %21 = vector.load %arg6[%c0_31, %c0_32, %c0_33] : memref<1x64x128xf32, #tpu.memory_space<vmem>>, vector<1x64x128xf32>
      tpu.vector_store %arg6[%c0_31, %c0_32, %c0_33], %20 {strides = array<i32>} : memref<1x64x128xf32, #tpu.memory_space<vmem>>, vector<1x64x128xf32>,
      %cst_34 = arith.constant 0xFF800000 : f32
      %22 = vector.broadcast %cst_34 : f32 to vector<1x64x128xf32>
      %c0_35 = arith.constant 0 : index
      %c0_36 = arith.constant 0 : index
      %c0_37 = arith.constant 0 : index
      %23 = vector.load %arg7[%c0_35, %c0_36, %c0_37] : memref<1x64x128xf32, #tpu.memory_space<vmem>>, vector<1x64x128xf32>
      tpu.vector_store %arg7[%c0_35, %c0_36, %c0_37], %22 {strides = array<i32>} : memref<1x64x128xf32, #tpu.memory_space<vmem>>, vector<1x64x128xf32>,
    } else {
    }
    %c0 = arith.constant 0 : index
    %c0_1 = arith.constant 0 : index
    %c0_2 = arith.constant 0 : index
    %3 = vector.load %arg2[%c0, %c0_1, %c0_2] : memref<1x64x256xf32, #tpu.memory_space<vmem>>, vector<1x64x128xf32>
    %c0_3 = arith.constant 0 : index
    %c0_4 = arith.constant 0 : index
    %c0_5 = arith.constant 0 : index
    %4 = vector.load %arg6[%c0_3, %c0_4, %c0_5] : memref<1x64x128xf32, #tpu.memory_space<vmem>>, vector<1x64x128xf32>
    %5 = arith.addf %4, %3 : vector<1x64x128xf32>
    %c0_6 = arith.constant 0 : index
    %c0_7 = arith.constant 0 : index
    %c0_8 = arith.constant 0 : index
    %6 = vector.load %arg6[%c0_6, %c0_7, %c0_8] : memref<1x64x128xf32, #tpu.memory_space<vmem>>, vector<1x64x128xf32>
    tpu.vector_store %arg6[%c0_6, %c0_7, %c0_8], %5 {strides = array<i32>} : memref<1x64x128xf32, #tpu.memory_space<vmem>>, vector<1x64x128xf32>,
    %c0_9 = arith.constant 0 : index
    %c0_10 = arith.constant 0 : index
    %c0_11 = arith.constant 0 : index
    %7 = vector.load %arg7[%c0_9, %c0_10, %c0_11] : memref<1x64x128xf32, #tpu.memory_space<vmem>>, vector<1x64x128xf32>
    %8 = arith.maximumf %7, %3 : vector<1x64x128xf32>
    %c0_12 = arith.constant 0 : index
    %c0_13 = arith.constant 0 : index
    %c0_14 = arith.constant 0 : index
    %9 = vector.load %arg7[%c0_12, %c0_13, %c0_14] : memref<1x64x128xf32, #tpu.memory_space<vmem>>, vector<1x64x128xf32>
    tpu.vector_store %arg7[%c0_12, %c0_13, %c0_14], %8 {strides = array<i32>} : memref<1x64x128xf32, #tpu.memory_space<vmem>>, vector<1x64x128xf32>,
    %c0_15 = arith.constant 0 : index
    %c0_16 = arith.constant 0 : index
    %c128 = arith.constant 128 : index
    %10 = vector.load %arg2[%c0_15, %c0_16, %c128] : memref<1x64x256xf32, #tpu.memory_space<vmem>>, vector<1x64x128xf32>
    %c0_17 = arith.constant 0 : index
    %c0_18 = arith.constant 0 : index
    %c0_19 = arith.constant 0 : index
    %11 = vector.load %arg6[%c0_17, %c0_18, %c0_19] : memref<1x64x128xf32, #tpu.memory_space<vmem>>, vector<1x64x128xf32>
    %12 = arith.addf %11, %10 : vector<1x64x128xf32>
    %c0_20 = arith.constant 0 : index
    %c0_21 = arith.constant 0 : index
    %c0_22 = arith.constant 0 : index
    %13 = vector.load %arg6[%c0_20, %c0_21, %c0_22] : memref<1x64x128xf32, #tpu.memory_space<vmem>>, vector<1x64x128xf32>
    tpu.vector_store %arg6[%c0_20, %c0_21, %c0_22], %12 {strides = array<i32>} : memref<1x64x128xf32, #tpu.memory_space<vmem>>, vector<1x64x128xf32>,
    %c0_23 = arith.constant 0 : index
    %c0_24 = arith.constant 0 : index
    %c0_25 = arith.constant 0 : index
    %14 = vector.load %arg7[%c0_23, %c0_24, %c0_25] : memref<1x64x128xf32, #tpu.memory_space<vmem>>, vector<1x64x128xf32>
    %15 = arith.maximumf %14, %10 : vector<1x64x128xf32>
    %c0_26 = arith.constant 0 : index
    %c0_27 = arith.constant 0 : index
    %c0_28 = arith.constant 0 : index
    %16 = vector.load %arg7[%c0_26, %c0_27, %c0_28] : memref<1x64x128xf32, #tpu.memory_space<vmem>>, vector<1x64x128xf32>
    tpu.vector_store %arg7[%c0_26, %c0_27, %c0_28], %15 {strides = array<i32>} : memref<1x64x128xf32, #tpu.memory_space<vmem>>, vector<1x64x128xf32>,
    %c0_i32_29 = arith.constant 0 : i32
    %17 = arith.cmpi eq, %arg1, %c0_i32_29 : i32
    %18 = arith.extui %17 : i1 to i32
    %c0_i32_30 = arith.constant 0 : i32
    %19 = arith.cmpi ne, %18, %c0_i32_30 : i32
    scf.if %19 {
      %c0_31 = arith.constant 0 : index
      %c0_32 = arith.constant 0 : index
      %c0_33 = arith.constant 0 : index
      %20 = vector.load %arg6[%c0_31, %c0_32, %c0_33] : memref<1x64x128xf32, #tpu.memory_space<vmem>>, vector<1x64x128xf32>
      %cst = arith.constant dense<0.000000e+00> : vector<1x64xf32>
      %21 = vector.multi_reduction <add>, %20, %cst [2] : vector<1x64x128xf32> to vector<1x64xf32>
      %cst_34 = arith.constant 3.906250e-03 : f32
      %22 = vector.broadcast %cst_34 : f32 to vector<1x64xf32>
      %23 = arith.mulf %21, %22 : vector<1x64xf32>
      %c0_35 = arith.constant 0 : index
      %c0_36 = arith.constant 0 : index
      %c0_37 = arith.constant 0 : index
      %24 = vector.load %arg7[%c0_35, %c0_36, %c0_37] : memref<1x64x128xf32, #tpu.memory_space<vmem>>, vector<1x64x128xf32>
      %cst_38 = arith.constant dense<0xFF800000> : vector<1x64xf32>
      %25 = vector.multi_reduction <maximumf>, %24, %cst_38 [2] : vector<1x64x128xf32> to vector<1x64xf32>
      %26 = tpu.concatenate %23, %25 in 0 : vector<1x64xf32>, vector<1x64xf32> -> vector<2x64xf32>
      %c0_39 = arith.constant 0 : index
      %c0_40 = arith.constant 0 : index
      %27 = vector.load %arg3[%c0_39, %c0_40] : memref<64x4xf32, #tpu.memory_space<vmem>>, vector<64x4xf32>
      %cst_41 = arith.constant dense<0.000000e+00> : vector<2x4xf32>
      %28 = tpu.matmul %26, %27, %cst_41 {dimension_numbers = #tpu.dot_dimension_numbers<[1], [0], [0], [1], [0, 0, 1, 1], [], []>} : vector<2x64xf32>, vector<64x4xf32>, vector<2x4xf32> -> vector<2x4xf32>
      %cst_42 = arith.constant 0.000000e+00 : f32
      %29 = vector.broadcast %cst_42 : f32 to vector<2x4xf32>
      %30 = arith.maximumf %28, %29 : vector<2x4xf32>
      %c0_43 = arith.constant 0 : index
      %c0_44 = arith.constant 0 : index
      %31 = vector.load %arg4[%c0_43, %c0_44] : memref<4x64xf32, #tpu.memory_space<vmem>>, vector<4x64xf32>
      %cst_45 = arith.constant dense<0.000000e+00> : vector<2x64xf32>
      %32 = tpu.matmul %30, %31, %cst_45 {dimension_numbers = #tpu.dot_dimension_numbers<[1], [0], [0], [1], [0, 0, 1, 1], [], []>} : vector<2x4xf32>, vector<4x64xf32>, vector<2x64xf32> -> vector<2x64xf32>
      %33 = vector.extract_strided_slice %32 {offsets = [0, 0], sizes = [1, 64], strides = [1, 1]} : vector<2x64xf32> to vector<1x64xf32>
      %34 = vector.extract_strided_slice %32 {offsets = [1, 0], sizes = [1, 64], strides = [1, 1]} : vector<2x64xf32> to vector<1x64xf32>
      %35 = arith.addf %33, %34 : vector<1x64xf32>
      %36 = arith.negf %35 : vector<1x64xf32>
      %37 = math.exp %36 : vector<1x64xf32>
      %cst_46 = arith.constant 1.000000e+00 : f32
      %38 = vector.broadcast %cst_46 : f32 to vector<1x64xf32>
      %39 = arith.addf %38, %37 : vector<1x64xf32>
      %40 = arith.divf %38, %39 : vector<1x64xf32>
      %41 = vector.shape_cast %40 : vector<1x64xf32> to vector<1x1x64xf32>
      %c0_47 = arith.constant 0 : index
      %c0_48 = arith.constant 0 : index
      %c0_49 = arith.constant 0 : index
      %42 = vector.load %arg5[%c0_47, %c0_48, %c0_49] : memref<1x1x64xf32, #tpu.memory_space<vmem>>, vector<1x1x64xf32>
      tpu.vector_store %arg5[%c0_47, %c0_48, %c0_49], %41 {strides = array<i32>} : memref<1x1x64xf32, #tpu.memory_space<vmem>>, vector<1x1x64xf32>,
    } else {
    }
    return
  }
  func.func @transform_0(%arg0: i32, %arg1: i32) -> (i32, i32, i32) {
    %c0_i32 = arith.constant 0 : i32
    %c0_i32_0 = arith.constant 0 : i32
    return %arg0, %c0_i32, %arg1 : i32, i32, i32
  }
  func.func @transform_1(%arg0: i32, %arg1: i32) -> (i32, i32) {
    %c0_i32 = arith.constant 0 : i32
    %c0_i32_0 = arith.constant 0 : i32
    %c0_i32_1 = arith.constant 0 : i32
    return %c0_i32, %c0_i32_0 : i32, i32
  }
  func.func @transform_2(%arg0: i32, %arg1: i32) -> (i32, i32) {
    %c0_i32 = arith.constant 0 : i32
    %c0_i32_0 = arith.constant 0 : i32
    %c0_i32_1 = arith.constant 0 : i32
    return %c0_i32, %c0_i32_0 : i32, i32
  }
  func.func @transform_3(%arg0: i32, %arg1: i32) -> (i32, i32, i32) {
    %c0_i32 = arith.constant 0 : i32
    %c0_i32_0 = arith.constant 0 : i32
    %c0_i32_1 = arith.constant 0 : i32
    return %arg0, %c0_i32, %c0_i32_0 : i32, i32, i32
  }
}

</mosaic_0001>

<llo_original>
// kernel: tpu_custom_call.1
$region0: #{tpu_custom_call.1}
  #allocation0 [shape = 'u32[]', space=smem, size = 0x4, offset = 0x4, fixed_abs, tag = 'smem constant byte address 0x4 - core index']
  #allocation1 [shape = 'u32[144,128]{1,0:T(1,128)}', space=vmem, size = 0x12000, scoped, tag = 'internal scratch']
  #allocation2 [shape = 'f32[1,64,128]{2,1,0:T(8,128)}', space=vmem, size = 0x8000, scoped, tag = 'scratch operand']
  #allocation3 [shape = 'f32[1,64,128]{2,1,0:T(8,128)}', space=vmem, size = 0x8000, scoped, tag = 'scratch operand']
  %s0 = inlined_call_operand.hbm [shape: f32[2,64,256], index: 0, kind: input, shape index: {}]
  %s1 = inlined_call_operand.vmem [shape: f32[64,4], index: 1, kind: input, shape index: {}]
  %s2 = inlined_call_operand.vmem [shape: f32[4,64], index: 2, kind: input, shape index: {}]
  %s3 = inlined_call_operand.hbm [shape: f32[2,1,64], index: 3, kind: output, shape index: {}]
  %s4 = sld [smem:[#allocation0]]
  $region57: #{tpu_custom_call.1} parent=0
    _
  %s6 = ssub.s32 1, %s4
  %s7 = scalar_select 0, %s6, %s4
  $region1: #{tpu_custom_call.1} parent=0
    #allocation4 [shape = 'u8[131072]{0}', space=vmem, size = 0x20000, scoped, tag = 'input window, operand 0']
    #allocation5 [shape = 's32[2]{0}', space=sflag, size = 0x8, scoped, tag = 'scoped memory for tpu_custom_call.1']
    #allocation6 [shape = 's32[2]{0}', space=sflag, size = 0x8, scoped, tag = 'scoped memory for tpu_custom_call.1']
    #allocation7 [shape = 'u8[1024]{0}', space=vmem, size = 0x400, scoped, tag = 'output window, operand 0']
    %8 = vsyncpa [#allocation5], 0
    %s9 = scalar_lea.sflag [#allocation5], 1
    %10 = vsyncpa %s9, 0
    %11 = vsyncpa [#allocation6], 0
    %s12 = scalar_lea.sflag [#allocation6], 1
    %13 = vsyncpa %s12, 0
    loop: start=0, step=1, limit=4
    $region2: #{tpu_custom_call.1} parent=1 // loop_pre_header
      _
    $region3: #{tpu_custom_call.1} parent=1 // loop_header
      %s15 = sphi 0, %s19
      %p16 = scmp.ge.s32.totalorder %s15, 4
      %s22 = sphi 0, %s34
      %s23 = sphi 0, %s30
      %s24 = sphi 0, %s22
      %s25 = sphi 0, %s23
      %s26 = sphi 0, %s24
      %s27 = sphi 0, %s25
      %s39 = sphi 0, %s41
      %s42 = sphi 0, %s39
      %s43 = sphi 0, %s42
      %s59 = sphi 0, %s43
      %s63 = sphi 0, %s63
      %s65 = sphi 0, %s63
      %s66 = sphi 0, %s65
      %s80 = sphi 0, %s66
      %s84 = sphi 0, %s84
      %s86 = sphi 0, %s84
      %s87 = sphi 0, %s86
      %s101 = sphi 0, %s87
      %s107 = sphi 0, %s109
      %s110 = sphi 0, %s107
      %s111 = sphi 0, %s110
      %s127 = sphi 0, %s111
    $region4: #{tpu_custom_call.1} parent=1 // loop_header_branch
      %18 = sbr.rel (%p16) target = $region8
    $region5: #{tpu_custom_call.1} parent=1 // loop_body
      %s20 = ssub.s32 %s15, 1
      %s21 = ssub.s32 %s15, 2
      %s28 = sadd.s32 1, %s23
      %p29 = scmp.ge.s32.totalorder %s28, 1
      %s30 = scalar_select %p29, 0, %s28
      %s31 = sadd.s32 1, %s22
      %s32 = scalar_select %p29, %s31, %s22
      %p33 = scmp.ge.s32.totalorder %s32, 2
      %s34 = scalar_select %p33, 0, %s32
      %s35 = ssub.s32 %s22, %s34
      %s36 = ssub.s32 %s23, %s30
      %s37 = sor.u32 %s35, %s36
      %p38 = scmp.eq.s32.totalorder %s37, 0
      %s40 = sadd.s32 %s39, 1
      %s41 = scalar_select %p38, %s39, %s40
      %p44 = pneg %p38
      %p45 = scmp.eq.s32.totalorder %s15, 1
      %p46 = por %p44, %p45
      %p47 = scmp.ne.s32.totalorder %s39, %s42
      %p48 = scmp.eq.s32.totalorder %s15, 0
      %p49 = por %p47, %p48
      %p50 = scmp.ne.s32.totalorder %s39, %s42
      %p51 = scmp.eq.s32.totalorder %s20, 1
      %p52 = por %p50, %p51
      %p53 = scmp.ne.s32.totalorder %s42, %s43
      %p54 = scmp.eq.s32.totalorder %s20, 0
      %p55 = por %p53, %p54
      %p56 = scmp.ne.s32.totalorder %s42, %s43
      %p57 = scmp.eq.s32.totalorder %s21, 1
      %p58 = por %p56, %p57
      %p60 = scmp.ne.s32.totalorder %s43, %s59
      %p61 = scmp.eq.s32.totalorder %s21, 0
      %p62 = por %p60, %p61
      %s64 = sadd.s32 %s63, 1
      %p67 = scmp.eq.s32.totalorder %s15, 1
      %p68 = scmp.ne.s32.totalorder %s63, %s65
      %p69 = scmp.eq.s32.totalorder %s15, 0
      %p70 = por %p68, %p69
      %p71 = scmp.ne.s32.totalorder %s63, %s65
      %p72 = scmp.eq.s32.totalorder %s20, 1
      %p73 = por %p71, %p72
      %p74 = scmp.ne.s32.totalorder %s65, %s66
      %p75 = scmp.eq.s32.totalorder %s20, 0
      %p76 = por %p74, %p75
      %p77 = scmp.ne.s32.totalorder %s65, %s66
      %p78 = scmp.eq.s32.totalorder %s21, 1
      %p79 = por %p77, %p78
      %p81 = scmp.ne.s32.totalorder %s66, %s80
      %p82 = scmp.eq.s32.totalorder %s21, 0
      %p83 = por %p81, %p82
      %s85 = sadd.s32 %s84, 1
      %p88 = scmp.eq.s32.totalorder %s15, 1
      %p89 = scmp.ne.s32.totalorder %s84, %s86
      %p90 = scmp.eq.s32.totalorder %s15, 0
      %p91 = por %p89, %p90
      %p92 = scmp.ne.s32.totalorder %s84, %s86
      %p93 = scmp.eq.s32.totalorder %s20, 1
      %p94 = por %p92, %p93
      %p95 = scmp.ne.s32.totalorder %s86, %s87
      %p96 = scmp.eq.s32.totalorder %s20, 0
      %p97 = por %p95, %p96
      %p98 = scmp.ne.s32.totalorder %s86, %s87
      %p99 = scmp.eq.s32.totalorder %s21, 1
      %p100 = por %p98, %p99
      %p102 = scmp.ne.s32.totalorder %s87, %s101
      %p103 = scmp.eq.s32.totalorder %s21, 0
      %p104 = por %p102, %p103
      %s105 = ssub.s32 %s22, %s34
      %p106 = scmp.eq.s32.totalorder %s105, 0
      %s108 = sadd.s32 %s107, 1
      %s109 = scalar_select %p106, %s107, %s108
      %p112 = pneg %p106
      %p113 = scmp.eq.s32.totalorder %s15, 1
      %p114 = por %p112, %p113
      %p115 = scmp.ne.s32.totalorder %s107, %s110
      %p116 = scmp.eq.s32.totalorder %s15, 0
      %p117 = por %p115, %p116
      %p118 = scmp.ne.s32.totalorder %s107, %s110
      %p119 = scmp.eq.s32.totalorder %s20, 1
      %p120 = por %p118, %p119
      %p121 = scmp.ne.s32.totalorder %s110, %s111
      %p122 = scmp.eq.s32.totalorder %s20, 0
      %p123 = por %p121, %p122
      %p124 = scmp.ne.s32.totalorder %s110, %s111
      %p125 = scmp.eq.s32.totalorder %s21, 1
      %p126 = por %p124, %p125
      %p128 = scmp.ne.s32.totalorder %s111, %s127
      %p129 = scmp.eq.s32.totalorder %s21, 0
      %p130 = por %p128, %p129
      %p131 = scmp.le.s32.totalorder 1, %s15
      %p132 = scmp.lt.s32.totalorder %s15, 3
      %p133 = pnand %p131, %p132
      %p134 = pneg %p133
      // Predicated region
      $region9: #{tpu_custom_call.1} parent=5 // pred_check
        _
      $region10: #{tpu_custom_call.1} parent=5 // pred_check_branch
        %136 = sbr.rel (%p133) target = $region12
      $region11: #{tpu_custom_call.1} parent=5 // pred_region
        %s137 = ssub.s32 %s15, 1
        // Predicated region
        $region13: #{tpu_custom_call.1} parent=11 // pred_check
          %p138 = pneg %p76
        $region14: #{tpu_custom_call.1} parent=11 // pred_check_branch
          %140 = sbr.rel (%p138) target = $region16
        $region15: #{tpu_custom_call.1} parent=11 // pred_region
          _
        $region16: #{tpu_custom_call.1} parent=11 // pred_fallthru
          _
        // Predicated region
        $region17: #{tpu_custom_call.1} parent=11 // pred_check
          %p141 = pneg %p97
        $region18: #{tpu_custom_call.1} parent=11 // pred_check_branch
          %143 = sbr.rel (%p141) target = $region20
        $region19: #{tpu_custom_call.1} parent=11 // pred_region
          _
        $region20: #{tpu_custom_call.1} parent=11 // pred_fallthru
          _
      $region12: #{tpu_custom_call.1} parent=5 // pred_fallthru
        _
      %p144 = scmp.lt.s32.totalorder %s15, 2
      // Predicated region
      $region21: #{tpu_custom_call.1} parent=5 // pred_check
        %p145 = pneg %p144
      $region22: #{tpu_custom_call.1} parent=5 // pred_check_branch
        %147 = sbr.rel (%p145) target = $region24
      $region23: #{tpu_custom_call.1} parent=5 // pred_region
        // Predicated region
        $region25: #{tpu_custom_call.1} parent=23 // pred_check
          %p148 = pneg %p49
        $region26: #{tpu_custom_call.1} parent=23 // pred_check_branch
          %150 = sbr.rel (%p148) target = $region28
        $region27: #{tpu_custom_call.1} parent=23 // pred_region
          %s151 = sand.u32 %s39, 1
          %s152 = scalar_lea.sflag [#allocation5], %s151
          %s153 = sand.u32 %s39, 1
          %s154 = smul.addr %s153, 128
          %s155 = scalar_lea.vmem [#allocation4], %s154
          %s156 = smul.u32 2, %s23
          %s158 = ssub.s32 2048, 2048
          %159 = vsyncadd %s152, %s158
          %s160 = smul.addr %s22, 16
          %s161 = sadd.s32 %s156, %s160
          %s162 = smul.addr %s161, 128
          %s163 = scalar_lea.hbm %s0, %s162
          %s164 = sshll.u32 %s155, 4
          %s165 = int_to_ptr.vmem [resolvable:$true] %s164
          %170 = dma.hbm_to_vmem [thread:$0]  %s163, 2048, %s165, %s152, 256, 256, 16
        $region28: #{tpu_custom_call.1} parent=23 // pred_fallthru
          _
      $region24: #{tpu_custom_call.1} parent=5 // pred_fallthru
        _
      %p171 = scmp.le.s32.totalorder 1, %s15
      %p172 = scmp.lt.s32.totalorder %s15, 3
      %p173 = pnand %p171, %p172
      %p174 = pneg %p173
      // Predicated region
      $region29: #{tpu_custom_call.1} parent=5 // pred_check
        _
      $region30: #{tpu_custom_call.1} parent=5 // pred_check_branch
        %176 = sbr.rel (%p173) target = $region32
      $region31: #{tpu_custom_call.1} parent=5 // pred_region
        %s177 = ssub.s32 %s15, 1
        %s178 = sand.u32 %s42, 1
        %s179 = scalar_lea.sflag [#allocation5], %s178
        %s180 = sand.u32 %s42, 1
        %s181 = smul.addr %s180, 128
        %s182 = scalar_lea.vmem [#allocation4], %s181
        // Predicated region
        $region33: #{tpu_custom_call.1} parent=31 // pred_check
          %p183 = pneg %p55
        $region34: #{tpu_custom_call.1} parent=31 // pred_check_branch
          %185 = sbr.rel (%p183) target = $region36
        $region35: #{tpu_custom_call.1} parent=31 // pred_region
          %186 = dma.done %s179, 2048
        $region36: #{tpu_custom_call.1} parent=31 // pred_fallthru
          _
        %s187 = sand.u32 %s42, 1
        %s188 = scalar_lea.sflag [#allocation5], %s187
        %s189 = sand.u32 %s42, 1
        %s190 = smul.addr %s189, 128
        %s191 = scalar_lea.vmem [#allocation4], %s190
        %p192 = pneg %p55
        %p193 = pneg %p52
        %p194 = pneg %p76
        %p195 = pneg %p73
        %p196 = pneg %p97
        %p197 = pneg %p94
        %p198 = pneg %p123
        %p199 = pneg %p120
        %s200 = sand.u32 %s110, 1
        %s201 = scalar_lea.sflag [#allocation6], %s200
        %s202 = sand.u32 %s110, 1
        %s203 = scalar_lea.vmem [#allocation7], %s202
        %s204 = smul.u32 2, %s25
        %p205 = scmp.eq.s32.totalorder %s25, 0
        // Predicated region
        $region37: #{tpu_custom_call.1} parent=31 // pred_check
          %p206 = pneg %p205
        $region38: #{tpu_custom_call.1} parent=31 // pred_check_branch
          %208 = sbr.rel (%p206) target = $region40
        $region39: #{tpu_custom_call.1} parent=31 // pred_region
          %209 = vst [vmem:[#allocation2] sm:$0xff] 0.0
          %210 = vst [vmem:[#allocation2 + $0x8] sm:$0xff] 0.0
          %211 = vst [vmem:[#allocation2 + $0x10] sm:$0xff] 0.0
          %212 = vst [vmem:[#allocation2 + $0x18] sm:$0xff] 0.0
          %213 = vst [vmem:[#allocation2 + $0x20] sm:$0xff] 0.0
          %214 = vst [vmem:[#allocation2 + $0x28] sm:$0xff] 0.0
          %215 = vst [vmem:[#allocation2 + $0x30] sm:$0xff] 0.0
          %216 = vst [vmem:[#allocation2 + $0x38] sm:$0xff] 0.0
          %217 = vst [vmem:[#allocation3] sm:$0xff] -inf
          %218 = vst [vmem:[#allocation3 + $0x8] sm:$0xff] -inf
          %219 = vst [vmem:[#allocation3 + $0x10] sm:$0xff] -inf
          %220 = vst [vmem:[#allocation3 + $0x18] sm:$0xff] -inf
          %221 = vst [vmem:[#allocation3 + $0x20] sm:$0xff] -inf
          %222 = vst [vmem:[#allocation3 + $0x28] sm:$0xff] -inf
          %223 = vst [vmem:[#allocation3 + $0x30] sm:$0xff] -inf
          %224 = vst [vmem:[#allocation3 + $0x38] sm:$0xff] -inf
        $region40: #{tpu_custom_call.1} parent=31 // pred_fallthru
          _
        %v225 = vld [vmem:[%s182] sm:$0xff]
        %v226 = vld [vmem:[%s182 + $0x10] sm:$0xff]
        %v227 = vld [vmem:[%s182 + $0x20] sm:$0xff]
        %v228 = vld [vmem:[%s182 + $0x30] sm:$0xff]
        %v229 = vld [vmem:[%s182 + $0x40] sm:$0xff]
        %v230 = vld [vmem:[%s182 + $0x50] sm:$0xff]
        %v231 = vld [vmem:[%s182 + $0x60] sm:$0xff]
        %v232 = vld [vmem:[%s182 + $0x70] sm:$0xff]
        %v233 = vld [vmem:[#allocation2] sm:$0xff]
        %v234 = vld [vmem:[#allocation2 + $0x8] sm:$0xff]
        %v235 = vld [vmem:[#allocation2 + $0x10] sm:$0xff]
        %v236 = vld [vmem:[#allocation2 + $0x18] sm:$0xff]
        %v237 = vld [vmem:[#allocation2 + $0x20] sm:$0xff]
        %v238 = vld [vmem:[#allocation2 + $0x28] sm:$0xff]
        %v239 = vld [vmem:[#allocation2 + $0x30] sm:$0xff]
        %v240 = vld [vmem:[#allocation2 + $0x38] sm:$0xff]
        %v241 = vadd.f32 %v233, %v225
        %v242 = vadd.f32 %v234, %v226
        %v243 = vadd.f32 %v235, %v227
        %v244 = vadd.f32 %v236, %v228
        %v245 = vadd.f32 %v237, %v229
        %v246 = vadd.f32 %v238, %v230
        %v247 = vadd.f32 %v239, %v231
        %v248 = vadd.f32 %v240, %v232
        %249 = vst [vmem:[#allocation2] sm:$0xff] %v241
        %250 = vst [vmem:[#allocation2 + $0x8] sm:$0xff] %v242
        %251 = vst [vmem:[#allocation2 + $0x10] sm:$0xff] %v243
        %252 = vst [vmem:[#allocation2 + $0x18] sm:$0xff] %v244
        %253 = vst [vmem:[#allocation2 + $0x20] sm:$0xff] %v245
        %254 = vst [vmem:[#allocation2 + $0x28] sm:$0xff] %v246
        %255 = vst [vmem:[#allocation2 + $0x30] sm:$0xff] %v247
        %256 = vst [vmem:[#allocation2 + $0x38] sm:$0xff] %v248
        %v257 = vld [vmem:[#allocation3] sm:$0xff]
        %v258 = vld [vmem:[#allocation3 + $0x8] sm:$0xff]
        %v259 = vld [vmem:[#allocation3 + $0x10] sm:$0xff]
        %v260 = vld [vmem:[#allocation3 + $0x18] sm:$0xff]
        %v261 = vld [vmem:[#allocation3 + $0x20] sm:$0xff]
        %v262 = vld [vmem:[#allocation3 + $0x28] sm:$0xff]
        %v263 = vld [vmem:[#allocation3 + $0x30] sm:$0xff]
        %v264 = vld [vmem:[#allocation3 + $0x38] sm:$0xff]
        %v265 = vmax.f32 %v257, %v225
        %v266 = vmax.f32 %v258, %v226
        %v267 = vmax.f32 %v259, %v227
        %v268 = vmax.f32 %v260, %v228
        %v269 = vmax.f32 %v261, %v229
        %v270 = vmax.f32 %v262, %v230
        %v271 = vmax.f32 %v263, %v231
        %v272 = vmax.f32 %v264, %v232
        %273 = vst [vmem:[#allocation3] sm:$0xff] %v265
        %274 = vst [vmem:[#allocation3 + $0x8] sm:$0xff] %v266
        %275 = vst [vmem:[#allocation3 + $0x10] sm:$0xff] %v267
        %276 = vst [vmem:[#allocation3 + $0x18] sm:$0xff] %v268
        %277 = vst [vmem:[#allocation3 + $0x20] sm:$0xff] %v269
        %278 = vst [vmem:[#allocation3 + $0x28] sm:$0xff] %v270
        %279 = vst [vmem:[#allocation3 + $0x30] sm:$0xff] %v271
        %280 = vst [vmem:[#allocation3 + $0x38] sm:$0xff] %v272
        %v281 = vld [vmem:[%s182 + $0x8] sm:$0xff]
        %v282 = vld [vmem:[%s182 + $0x18] sm:$0xff]
        %v283 = vld [vmem:[%s182 + $0x28] sm:$0xff]
        %v284 = vld [vmem:[%s182 + $0x38] sm:$0xff]
        %v285 = vld [vmem:[%s182 + $0x48] sm:$0xff]
        %v286 = vld [vmem:[%s182 + $0x58] sm:$0xff]
        %v287 = vld [vmem:[%s182 + $0x68] sm:$0xff]
        %v288 = vld [vmem:[%s182 + $0x78] sm:$0xff]
        %v289 = vld [vmem:[#allocation2] sm:$0xff]
        %v290 = vld [vmem:[#allocation2 + $0x8] sm:$0xff]
        %v291 = vld [vmem:[#allocation2 + $0x10] sm:$0xff]
        %v292 = vld [vmem:[#allocation2 + $0x18] sm:$0xff]
        %v293 = vld [vmem:[#allocation2 + $0x20] sm:$0xff]
        %v294 = vld [vmem:[#allocation2 + $0x28] sm:$0xff]
        %v295 = vld [vmem:[#allocation2 + $0x30] sm:$0xff]
        %v296 = vld [vmem:[#allocation2 + $0x38] sm:$0xff]
        %v297 = vadd.f32 %v289, %v281
        %v298 = vadd.f32 %v290, %v282
        %v299 = vadd.f32 %v291, %v283
        %v300 = vadd.f32 %v292, %v284
        %v301 = vadd.f32 %v293, %v285
        %v302 = vadd.f32 %v294, %v286
        %v303 = vadd.f32 %v295, %v287
        %v304 = vadd.f32 %v296, %v288
        %305 = vst [vmem:[#allocation2] sm:$0xff] %v297
        %306 = vst [vmem:[#allocation2 + $0x8] sm:$0xff] %v298
        %307 = vst [vmem:[#allocation2 + $0x10] sm:$0xff] %v299
        %308 = vst [vmem:[#allocation2 + $0x18] sm:$0xff] %v300
        %309 = vst [vmem:[#allocation2 + $0x20] sm:$0xff] %v301
        %310 = vst [vmem:[#allocation2 + $0x28] sm:$0xff] %v302
        %311 = vst [vmem:[#allocation2 + $0x30] sm:$0xff] %v303
        %312 = vst [vmem:[#allocation2 + $0x38] sm:$0xff] %v304
        %v313 = vld [vmem:[#allocation3] sm:$0xff]
        %v314 = vld [vmem:[#allocation3 + $0x8] sm:$0xff]
        %v315 = vld [vmem:[#allocation3 + $0x10] sm:$0xff]
        %v316 = vld [vmem:[#allocation3 + $0x18] sm:$0xff]
        %v317 = vld [vmem:[#allocation3 + $0x20] sm:$0xff]
        %v318 = vld [vmem:[#allocation3 + $0x28] sm:$0xff]
        %v319 = vld [vmem:[#allocation3 + $0x30] sm:$0xff]
        %v320 = vld [vmem:[#allocation3 + $0x38] sm:$0xff]
        %v321 = vmax.f32 %v313, %v281
        %v322 = vmax.f32 %v314, %v282
        %v323 = vmax.f32 %v315, %v283
        %v324 = vmax.f32 %v316, %v284
        %v325 = vmax.f32 %v317, %v285
        %v326 = vmax.f32 %v318, %v286
        %v327 = vmax.f32 %v319, %v287
        %v328 = vmax.f32 %v320, %v288
        %329 = vst [vmem:[#allocation3] sm:$0xff] %v321
        %330 = vst [vmem:[#allocation3 + $0x8] sm:$0xff] %v322
        %331 = vst [vmem:[#allocation3 + $0x10] sm:$0xff] %v323
        %332 = vst [vmem:[#allocation3 + $0x18] sm:$0xff] %v324
        %333 = vst [vmem:[#allocation3 + $0x20] sm:$0xff] %v325
        %334 = vst [vmem:[#allocation3 + $0x28] sm:$0xff] %v326
        %335 = vst [vmem:[#allocation3 + $0x30] sm:$0xff] %v327
        %336 = vst [vmem:[#allocation3 + $0x38] sm:$0xff] %v328
        // Predicated region
        $region41: #{tpu_custom_call.1} parent=31 // pred_check
          %p337 = pneg %p205
        $region42: #{tpu_custom_call.1} parent=31 // pred_check_branch
          %339 = sbr.rel (%p337) target = $region44
        $region43: #{tpu_custom_call.1} parent=31 // pred_region
          %v340 = vld [vmem:[#allocation2] sm:$0xff]
          %v341 = vld [vmem:[#allocation2 + $0x8] sm:$0xff]
          %v342 = vld [vmem:[#allocation2 + $0x10] sm:$0xff]
          %v343 = vld [vmem:[#allocation2 + $0x18] sm:$0xff]
          %v344 = vld [vmem:[#allocation2 + $0x20] sm:$0xff]
          %v345 = vld [vmem:[#allocation2 + $0x28] sm:$0xff]
          %v346 = vld [vmem:[#allocation2 + $0x30] sm:$0xff]
          %v347 = vld [vmem:[#allocation2 + $0x38] sm:$0xff]
          %348 = vadd.xlane.f32.xlu0 %v340
          %v349 = vpop.xlane.xlu0 %348
          %350 = vadd.xlane.f32.xlu0 %v341
          %v351 = vpop.xlane.xlu0 %350
          %352 = vadd.xlane.f32.xlu0 %v342
          %v353 = vpop.xlane.xlu0 %352
          %354 = vadd.xlane.f32.xlu0 %v343
          %v355 = vpop.xlane.xlu0 %354
          %356 = vadd.xlane.f32.xlu0 %v344
          %v357 = vpop.xlane.xlu0 %356
          %358 = vadd.xlane.f32.xlu0 %v345
          %v359 = vpop.xlane.xlu0 %358
          %360 = vadd.xlane.f32.xlu0 %v346
          %v361 = vpop.xlane.xlu0 %360
          %362 = vadd.xlane.f32.xlu0 %v347
          %v363 = vpop.xlane.xlu0 %362
          %v364 = vmul.f32 %v349, 0.00390625
          %v365 = vmul.f32 %v351, 0.00390625
          %v366 = vmul.f32 %v353, 0.00390625
          %v367 = vmul.f32 %v355, 0.00390625
          %v368 = vmul.f32 %v357, 0.00390625
          %v369 = vmul.f32 %v359, 0.00390625
          %v370 = vmul.f32 %v361, 0.00390625
          %v371 = vmul.f32 %v363, 0.00390625
          %v372 = vld [vmem:[#allocation3] sm:$0xff]
          %v373 = vld [vmem:[#allocation3 + $0x8] sm:$0xff]
          %v374 = vld [vmem:[#allocation3 + $0x10] sm:$0xff]
          %v375 = vld [vmem:[#allocation3 + $0x18] sm:$0xff]
          %v376 = vld [vmem:[#allocation3 + $0x20] sm:$0xff]
          %v377 = vld [vmem:[#allocation3 + $0x28] sm:$0xff]
          %v378 = vld [vmem:[#allocation3 + $0x30] sm:$0xff]
          %v379 = vld [vmem:[#allocation3 + $0x38] sm:$0xff]
          %380 = vmax.xlane.f32.xlu0 %v372
          %v381 = vpop.xlane.xlu0 %380
          %382 = vmax.xlane.f32.xlu0 %v373
          %v383 = vpop.xlane.xlu0 %382
          %384 = vmax.xlane.f32.xlu0 %v374
          %v385 = vpop.xlane.xlu0 %384
          %386 = vmax.xlane.f32.xlu0 %v375
          %v387 = vpop.xlane.xlu0 %386
          %388 = vmax.xlane.f32.xlu0 %v376
          %v389 = vpop.xlane.xlu0 %388
          %390 = vmax.xlane.f32.xlu0 %v377
          %v391 = vpop.xlane.xlu0 %390
          %392 = vmax.xlane.f32.xlu0 %v378
          %v393 = vpop.xlane.xlu0 %392
          %394 = vmax.xlane.f32.xlu0 %v379
          %v395 = vpop.xlane.xlu0 %394
          %v404 = vlaneseq
          %v405 = vand.u32 %v404, 127
          %v406 = vlaneseq
          %v407 = vshrl.u32 %v406, 7
          %v408 = vsub.s32 %v405, %v407
          %v409 = vrot.slane %v364, %v408
          %v410 = vadd.s32 %v405, 4294967288
          %v411 = vlaneseq
          %v412 = vshrl.u32 %v411, 7
          %v413 = vsub.s32 %v410, %v412
          %v414 = vrot.slane %v365, %v413
          %vm415 = vcmask 130112
          %v416 = vsel %vm415, %v414, %v409
          %v417 = vadd.s32 %v405, 4294967280
          %v418 = vlaneseq
          %v419 = vshrl.u32 %v418, 7
          %v420 = vsub.s32 %v417, %v419
          %v421 = vrot.slane %v366, %v420
          %vm422 = vcmask 195712
          %v423 = vsel %vm422, %v421, %v416
          %v424 = vadd.s32 %v405, 4294967272
          %v425 = vlaneseq
          %v426 = vshrl.u32 %v425, 7
          %v427 = vsub.s32 %v424, %v426
          %v428 = vrot.slane %v367, %v427
          %vm429 = vcmask 261312
          %v430 = vsel %vm429, %v428, %v423
          %v431 = vadd.s32 %v405, 4294967264
          %v432 = vlaneseq
          %v433 = vshrl.u32 %v432, 7
          %v434 = vsub.s32 %v431, %v433
          %v435 = vrot.slane %v368, %v434
          %vm436 = vcmask 326912
          %v437 = vsel %vm436, %v435, %v430
          %v438 = vadd.s32 %v405, 4294967256
          %v439 = vlaneseq
          %v440 = vshrl.u32 %v439, 7
          %v441 = vsub.s32 %v438, %v440
          %v442 = vrot.slane %v369, %v441
          %vm443 = vcmask 392512
          %v444 = vsel %vm443, %v442, %v437
          %v445 = vadd.s32 %v405, 4294967248
          %v446 = vlaneseq
          %v447 = vshrl.u32 %v446, 7
          %v448 = vsub.s32 %v445, %v447
          %v449 = vrot.slane %v370, %v448
          %vm450 = vcmask 458112
          %v451 = vsel %vm450, %v449, %v444
          %v452 = vadd.s32 %v405, 4294967240
          %v453 = vlaneseq
          %v454 = vshrl.u32 %v453, 7
          %v455 = vsub.s32 %v452, %v454
          %v456 = vrot.slane %v371, %v455
          %vm457 = vcmask 523712
          %v458 = vsel %vm457, %v456, %v451
          %v468 = vlaneseq
          %v469 = vshrl.u32 %v468, 7
          %v470 = vsub.s32 %v405, %v469
          %v471 = vrot.slane %v381, %v470
          %v472 = vlaneseq
          %v473 = vshrl.u32 %v472, 7
          %v474 = vsub.s32 %v410, %v473
          %v475 = vrot.slane %v383, %v474
          %v476 = vsel %vm415, %v475, %v471
          %v477 = vlaneseq
          %v478 = vshrl.u32 %v477, 7
          %v479 = vsub.s32 %v417, %v478
          %v480 = vrot.slane %v385, %v479
          %v481 = vsel %vm422, %v480, %v476
          %v482 = vlaneseq
          %v483 = vshrl.u32 %v482, 7
          %v484 = vsub.s32 %v424, %v483
          %v485 = vrot.slane %v387, %v484
          %v486 = vsel %vm429, %v485, %v481
          %v487 = vlaneseq
          %v488 = vshrl.u32 %v487, 7
          %v489 = vsub.s32 %v431, %v488
          %v490 = vrot.slane %v389, %v489
          %v491 = vsel %vm436, %v490, %v486
          %v492 = vlaneseq
          %v493 = vshrl.u32 %v492, 7
          %v494 = vsub.s32 %v438, %v493
          %v495 = vrot.slane %v391, %v494
          %v496 = vsel %vm443, %v495, %v491
          %v497 = vlaneseq
          %v498 = vshrl.u32 %v497, 7
          %v499 = vsub.s32 %v445, %v498
          %v500 = vrot.slane %v393, %v499
          %v501 = vsel %vm450, %v500, %v496
          %v502 = vlaneseq
          %v503 = vshrl.u32 %v502, 7
          %v504 = vsub.s32 %v452, %v503
          %v505 = vrot.slane %v395, %v504
          %v506 = vsel %vm457, %v505, %v501
          %vm508 = vcmask 1040384
          %v509 = vsel %vm508, %v458, %v506
          %v510 = vld [vmem:[%s1] sm:$0xff]
          %v511 = vld [vmem:[%s1 + $0x8] sm:$0xff]
          %v512 = vld [vmem:[%s1 + $0x10] sm:$0xff]
          %v513 = vld [vmem:[%s1 + $0x18] sm:$0xff]
          %v514 = vld [vmem:[%s1 + $0x20] sm:$0xff]
          %v515 = vld [vmem:[%s1 + $0x28] sm:$0xff]
          %v516 = vld [vmem:[%s1 + $0x30] sm:$0xff]
          %v517 = vld [vmem:[%s1 + $0x38] sm:$0xff]
          %vm518 = vcmask 523264
          %v520 = vsel %vm518, %v509, 0
          %522 = vmatprep.subr.mxu0 0.0
          %523 = vmatpush1.msra.mxu0 %v510
          %524 = vmatprep.subr.mxu0 0.0
          %525 = vmatpush1.msra.mxu0 %v511
          %526 = vmatprep.subr.mxu0 0.0
          %527 = vmatpush1.msra.mxu0 %v512
          %528 = vmatprep.subr.mxu0 0.0
          %529 = vmatpush1.msra.mxu0 %v513
          %530 = vmatprep.subr.mxu0 0.0
          %531 = vmatpush1.msra.mxu0 %v514
          %532 = vmatprep.subr.mxu0 0.0
          %533 = vmatpush1.msra.mxu0 %v515
          %534 = vmatprep.subr.mxu0 0.0
          %535 = vmatpush1.msra.mxu0 %v516
          %536 = vmatprep.subr.mxu0 0.0
          %537 = vmatpush1.msra.mxu0 %v517
          %538 = vmatprep.subr.mxu0 0.0
          %539 = vmatpush1.msra.mxu0 0.0
          %540 = vmatprep.subr.mxu0 0.0
          %541 = vmatpush1.msra.mxu0 0.0
          %542 = vmatprep.subr.mxu0 0.0
          %543 = vmatpush1.msra.mxu0 0.0
          %544 = vmatprep.subr.mxu0 0.0
          %545 = vmatpush1.msra.mxu0 0.0
          %546 = vmatprep.subr.mxu0 0.0
          %547 = vmatpush1.msra.mxu0 0.0
          %548 = vmatprep.subr.mxu0 0.0
          %549 = vmatpush1.msra.mxu0 0.0
          %550 = vmatprep.subr.mxu0 0.0
          %551 = vmatpush1.msra.mxu0 0.0
          %552 = vmatprep.subr.mxu0 0.0
          %553 = vmatpush1.msra.mxu0 0.0
          %554 = vmatprep.subr.mxu0 0.0
          %555 = vmatpush1.msra.mxu0 0.0
          %556 = vmatprep.subr.mxu0 0.0
          %557 = vmatpush1.msra.mxu0 0.0
          %558 = vmatprep.subr.mxu0 0.0
          %559 = vmatpush1.msra.mxu0 0.0
          %560 = vmatprep.subr.mxu0 0.0
          %561 = vmatpush1.msra.mxu0 0.0
          %562 = vmatprep.subr.mxu0 0.0
          %563 = vmatpush1.msra.mxu0 0.0
          %564 = vmatprep.subr.mxu0 0.0
          %565 = vmatpush1.msra.mxu0 0.0
          %566 = vmatprep.subr.mxu0 0.0
          %567 = vmatpush1.msra.mxu0 0.0
          %568 = vmatprep.subr.mxu0 0.0
          %569 = vmatpush1.msra.mxu0 0.0
          %570 = vmatprep.subr.mxu0 0.0
          %571 = vmatpush1.msra.mxu0 0.0
          %572 = vmatprep.subr.mxu0 0.0
          %573 = vmatpush1.msra.mxu0 0.0
          %574 = vmatprep.subr.mxu0 0.0
          %575 = vmatpush1.msra.mxu0 0.0
          %576 = vmatprep.subr.mxu0 0.0
          %577 = vmatpush1.msra.mxu0 0.0
          %578 = vmatprep.subr.mxu0 0.0
          %579 = vmatpush1.msra.mxu0 0.0
          %580 = vmatprep.subr.mxu0 0.0
          %581 = vmatpush1.msra.mxu0 0.0
          %582 = vmatprep.subr.mxu0 0.0
          %583 = vmatpush1.msra.mxu0 0.0
          %584 = vmatprep.subr.mxu0 0.0
          %585 = vmatpush1.msra.mxu0 0.0
          %586 = vmatprep.mubr.f32.mxu0 0.0
          %587 = vmatmul.mubr.f32.gmra.mrb[0].mxu0 %v520
          %v588 = vpop.f32.mrb[0].mxu0
          %v589 = vadd.f32 0.0, %v588
          %v590 = vpop.f32.mrb[0].mxu0
          %591 = vdwg.mxu0
          %v592 = vmax.f32 %v589, 0.0
          %v593 = vld [vmem:[%s2] sm:$0xf]
          %vm594 = vcmask 31744
          %v596 = vsel %vm594, %v592, 0
          %vm598 = vcmask 1043456
          %v600 = vsel %vm598, %v593, 0
          %602 = vmatprep.subr.mxu0 0.0
          %603 = vmatpush1.msra.mxu0 %v600
          %604 = vmatprep.subr.mxu0 0.0
          %605 = vmatpush1.msra.mxu0 0.0
          %606 = vmatprep.subr.mxu0 0.0
          %607 = vmatpush1.msra.mxu0 0.0
          %608 = vmatprep.subr.mxu0 0.0
          %609 = vmatpush1.msra.mxu0 0.0
          %610 = vmatprep.subr.mxu0 0.0
          %611 = vmatpush1.msra.mxu0 0.0
          %612 = vmatprep.subr.mxu0 0.0
          %613 = vmatpush1.msra.mxu0 0.0
          %614 = vmatprep.subr.mxu0 0.0
          %615 = vmatpush1.msra.mxu0 0.0
          %616 = vmatprep.subr.mxu0 0.0
          %617 = vmatpush1.msra.mxu0 0.0
          %618 = vmatprep.subr.mxu0 0.0
          %619 = vmatpush1.msra.mxu0 0.0
          %620 = vmatprep.subr.mxu0 0.0
          %621 = vmatpush1.msra.mxu0 0.0
          %622 = vmatprep.subr.mxu0 0.0
          %623 = vmatpush1.msra.mxu0 0.0
          %624 = vmatprep.subr.mxu0 0.0
          %625 = vmatpush1.msra.mxu0 0.0
          %626 = vmatprep.subr.mxu0 0.0
          %627 = vmatpush1.msra.mxu0 0.0
          %628 = vmatprep.subr.mxu0 0.0
          %629 = vmatpush1.msra.mxu0 0.0
          %630 = vmatprep.subr.mxu0 0.0
          %631 = vmatpush1.msra.mxu0 0.0
          %632 = vmatprep.subr.mxu0 0.0
          %633 = vmatpush1.msra.mxu0 0.0
          %634 = vmatprep.subr.mxu0 0.0
          %635 = vmatpush1.msra.mxu0 0.0
          %636 = vmatprep.subr.mxu0 0.0
          %637 = vmatpush1.msra.mxu0 0.0
          %638 = vmatprep.subr.mxu0 0.0
          %639 = vmatpush1.msra.mxu0 0.0
          %640 = vmatprep.subr.mxu0 0.0
          %641 = vmatpush1.msra.mxu0 0.0
          %642 = vmatprep.subr.mxu0 0.0
          %643 = vmatpush1.msra.mxu0 0.0
          %644 = vmatprep.subr.mxu0 0.0
          %645 = vmatpush1.msra.mxu0 0.0
          %646 = vmatprep.subr.mxu0 0.0
          %647 = vmatpush1.msra.mxu0 0.0
          %648 = vmatprep.subr.mxu0 0.0
          %649 = vmatpush1.msra.mxu0 0.0
          %650 = vmatprep.subr.mxu0 0.0
          %651 = vmatpush1.msra.mxu0 0.0
          %652 = vmatprep.subr.mxu0 0.0
          %653 = vmatpush1.msra.mxu0 0.0
          %654 = vmatprep.subr.mxu0 0.0
          %655 = vmatpush1.msra.mxu0 0.0
          %656 = vmatprep.subr.mxu0 0.0
          %657 = vmatpush1.msra.mxu0 0.0
          %658 = vmatprep.subr.mxu0 0.0
          %659 = vmatpush1.msra.mxu0 0.0
          %660 = vmatprep.subr.mxu0 0.0
          %661 = vmatpush1.msra.mxu0 0.0
          %662 = vmatprep.subr.mxu0 0.0
          %663 = vmatpush1.msra.mxu0 0.0
          %664 = vmatprep.subr.mxu0 0.0
          %665 = vmatpush1.msra.mxu0 0.0
          %666 = vmatprep.mubr.f32.mxu0 0.0
          %667 = vmatmul.mubr.f32.gmra.mrb[0].mxu0 %v596
          %v668 = vpop.f32.mrb[0].mxu0
          %v669 = vadd.f32 0.0, %v668
          %v670 = vpop.f32.mrb[0].mxu0
          %671 = vdwg.mxu0
          %v673 = vrot.slane %v669, 1
          %v675 = vadd.f32 %v669, %v673
          %v676 = vxor.u32 %v675, 2147483648
          %v677 = vmul.f32 %v676, 1.442695
          %v678 = vpow.pop %v677
          %v679 = vadd.f32 %v678, 1.0
          %v680 = vrcp.pop %v679
          %v681 = vmul.f32 1.0, %v680
          %vm682 = vcmask 516096
          %683 = vst.msk [vmem:[%s203] sm:$0x1] %vm682, %v681
        $region44: #{tpu_custom_call.1} parent=31 // pred_fallthru
          _
        %s684 = sand.u32 %s110, 1
        %s685 = scalar_lea.sflag [#allocation6], %s684
        %s686 = sand.u32 %s110, 1
        %s687 = scalar_lea.vmem [#allocation7], %s686
        // Predicated region
        $region45: #{tpu_custom_call.1} parent=31 // pred_check
          %p688 = pneg %p120
        $region46: #{tpu_custom_call.1} parent=31 // pred_check_branch
          %690 = sbr.rel (%p688) target = $region48
        $region47: #{tpu_custom_call.1} parent=31 // pred_region
          %s692 = ssub.s32 16, 16
          %693 = vsyncadd %s685, %s692
          %s694 = smul.addr %s24, 16
          %s695 = scalar_lea.hbm %s3, %s694
          %s697 = sshll.u32 %s687, 4
          %s698 = int_to_ptr.vmem [resolvable:$true] %s697
          %700 = dma.vmem_to_hbm [thread:$0]  %s698, 16, %s695, %s685
        $region48: #{tpu_custom_call.1} parent=31 // pred_fallthru
          _
      $region32: #{tpu_custom_call.1} parent=5 // pred_fallthru
        _
      %p701 = scmp.le.s32.totalorder 2, %s15
      // Predicated region
      $region49: #{tpu_custom_call.1} parent=5 // pred_check
        %p702 = pneg %p701
      $region50: #{tpu_custom_call.1} parent=5 // pred_check_branch
        %704 = sbr.rel (%p702) target = $region52
      $region51: #{tpu_custom_call.1} parent=5 // pred_region
        %s705 = ssub.s32 %s15, 2
        // Predicated region
        $region53: #{tpu_custom_call.1} parent=51 // pred_check
          %p706 = pneg %p126
        $region54: #{tpu_custom_call.1} parent=51 // pred_check_branch
          %708 = sbr.rel (%p706) target = $region56
        $region55: #{tpu_custom_call.1} parent=51 // pred_region
          %s709 = sand.u32 %s111, 1
          %s710 = scalar_lea.sflag [#allocation6], %s709
          %s711 = sand.u32 %s111, 1
          %s712 = scalar_lea.vmem [#allocation7], %s711
          %713 = dma.done %s710, 16
        $region56: #{tpu_custom_call.1} parent=51 // pred_fallthru
          _
      $region52: #{tpu_custom_call.1} parent=5 // pred_fallthru
        _
    $region6: #{tpu_custom_call.1} parent=1 // loop_footer
      %s19 = sadd.s32 1, %s15
    $region7: #{tpu_custom_call.1} parent=1 // loop_footer_branch
      %14 = sbr.rel target = $region3
    $region8: #{tpu_custom_call.1} parent=1 // loop_exit
      _
    %714 = vsyncpa [#allocation5], 1
    %s715 = scalar_lea.sflag [#allocation5], 1
    %716 = vsyncpa %s715, 1
    %717 = vsyncpa [#allocation6], 1
    %s718 = scalar_lea.sflag [#allocation6], 1
    %719 = vsyncpa %s718, 1

</llo_original>
